<compile_context>
chip_gen: v7x
topology: tpu7x:2x2x1
jax: 0.10.0
libtpu: 0.0.40
codegen_flags: <defaults>
</compile_context>

<pallas_src>
import jax
import jax.numpy as jnp
from jax.experimental import pallas as pl
from jax.experimental.pallas import tpu as pltpu


def _round_up(x, m):
    return (x + m - 1) // m * m


def _vmem_capacity_bytes():
    """Physical per-TensorCore VMEM (128 MiB v5e/v6e, 64 MiB v7x)."""
    try:
        return int(pltpu.get_tpu_info().vmem_capacity_bytes)
    except Exception:
        return 64 << 20  # conservative fallback (v7x size)


def _projector_kernel(x_ref, w1_ref, b1_ref, w2_ref, b2_ref, o_ref, h_ref):
    """One (row-tile i, out-column-tile j) grid step.

    h = relu(x @ W1 + b1) is computed once per row tile (inner grid index
    j == 0) and cached in VMEM scratch; every output-column tile j of the same
    row tile reuses it.  This is only valid while the j axis is "arbitrary"
    (never megacore-split) and iterated innermost per row tile.
    """
    @pl.when(pl.program_id(1) == 0)
    def _():
        x = x_ref[...].astype(w1_ref.dtype)                 # bf16 MXU operands
        h = jnp.dot(x, w1_ref[...], preferred_element_type=jnp.float32)
        h = jnp.maximum(h + b1_ref[...], 0.0)               # bias + ReLU in f32
        h_ref[...] = h.astype(h_ref.dtype)

    y = jnp.dot(h_ref[...], w2_ref[...], preferred_element_type=jnp.float32)
    o_ref[...] = (y + b2_ref[...]).astype(o_ref.dtype)


def make_multimodal_projector(w1, b1, w2, b2, *, compute_dtype=jnp.bfloat16,
                              out_dtype=None):
    """Pads / casts the weights ONCE and returns `project(x)`.

    w1: [in_dim, hidden]; b1: [hidden]; w2: [hidden, out_dim]; b2: [out_dim]
    (weights are [in, out], i.e. transposed w.r.t. PyTorch's Linear.weight).
    Note: with the default bf16 compute_dtype the intermediate loses precision
    vs. an all-f32 reference; pass compute_dtype=jnp.float32 for exactness.
    """
    in_dim, hidden = w1.shape
    hidden2, out_dim = w2.shape
    assert hidden2 == hidden and b1.shape == (hidden,) and b2.shape == (out_dim,)

    in_pad = _round_up(in_dim, 128)
    hidden_pad = _round_up(hidden, 128)
    out_pad = _round_up(out_dim, 128)

    # Zero-padding is mathematically inert; done once here, not per call.
    w1p = jnp.zeros((in_pad, hidden_pad), compute_dtype).at[:in_dim, :hidden].set(
        w1.astype(compute_dtype))
    w2p = jnp.zeros((hidden_pad, out_pad), compute_dtype).at[:hidden, :out_dim].set(
        w2.astype(compute_dtype))
    b1p = jnp.zeros((1, hidden_pad), jnp.float32).at[0, :hidden].set(
        b1.astype(jnp.float32))
    b2p = jnp.zeros((1, out_pad), jnp.float32).at[0, :out_dim].set(
        b2.astype(jnp.float32))

    w_item = jnp.dtype(compute_dtype).itemsize
    h_item = w_item
    vmem_cap = _vmem_capacity_bytes()

    def project(x):
        *lead, xd = x.shape
        assert xd == in_dim, f"expected last dim {in_dim}, got {xd}"
        o_dtype = x.dtype if out_dtype is None else out_dtype

        M = 1
        for d in lead:
            M *= d
        x2d = x.reshape(M, in_dim)

        x_item = jnp.dtype(x.dtype).itemsize
        o_item = jnp.dtype(o_dtype).itemsize
        sub = max(8, 32 // x_item)            # sublane granularity: 8 f32, 16 bf16

        # ------------------------------------------------------------------
        # Tile planning against physical VMEM (8 MiB headroom for Mosaic
        # internal scratch / semaphores).
        # ------------------------------------------------------------------
        budget = max(vmem_cap - (8 << 20), 16 << 20)
        w1_res = in_pad * hidden_pad * w_item + hidden_pad * 4      # W1 + b1 (1 buf)
        w2_res = hidden_pad * out_pad * w_item + out_pad * 4        # W2 + b2 (1 buf)

        def footprint(tm_, tn_, w2_resident_):
            f = (2 * tm_ * in_pad * x_item          # double-buffered x tiles
                 + w1_res                           # resident W1/b1
                 + 2 * tm_ * tn_ * o_item           # double-buffered out tiles
                 + tm_ * hidden_pad * h_item)       # h scratch
            if w2_resident_:
                f += w2_res
            else:                                   # streamed, double-buffered
                f += 2 * (hidden_pad * tn_ * w_item + tn_ * 4)
            return f

        tm_cap = _round_up(M, sub)
        tm = tn = None
        w2_resident = False
        # Preferred: W2 fully VMEM-resident (read from HBM exactly once), with
        # the largest row tile tm that fits the budget.
        for cand in (1024, 512, 256, 128, 64, 32, 16, 8):
            cand = min(_round_up(cand, sub), tm_cap)
            if footprint(cand, out_pad, True) <= budget:
                tm, tn, w2_resident = cand, out_pad, True
                break
        if tm is None:
            # Stream W2 column tiles.  tn is a multiple-of-128 divisor of
            # out_pad (no extra output padding) and tm is grown first so the
            # number of duplicate W2 reads (= number of row tiles) shrinks.
            divisors = [d for d in range(128, out_pad + 1, 128) if out_pad % d == 0]
            for cand_tm in (512, 256, 128, 64, 32, 16, 8):
                cand_tm = min(_round_up(cand_tm, sub), tm_cap)
                for cand_tn in sorted(divisors, reverse=True):
                    if footprint(cand_tm, cand_tn, False) <= budget:
                        tm, tn = cand_tm, cand_tn
                        break
                if tm is not None:
                    break
        if tm is None:  # pathological sizes: smallest legal tiles
            tm, tn = min(sub, tm_cap), 128

        m_pad = _round_up(M, tm)
        # v7x has 2 TensorCores sharing the "parallel" row axis: ensure >= 2
        # row tiles when rows can usefully be split (no-op on v5e/v6e).
        if m_pad // tm == 1 and tm >= 256 and M > tm // 2:
            tm //= 2
            m_pad = _round_up(M, tm)

        grid = (m_pad // tm, out_pad // tn)

        if m_pad != M or in_pad != in_dim:
            x2d = jnp.pad(x2d, ((0, m_pad - M), (0, in_pad - in_dim)))

        flops = 2 * M * (in_dim * hidden + hidden * out_dim)
        bytes_accessed = (M * in_dim * x_item
                          + in_pad * hidden_pad * w_item
                          + hidden_pad * out_pad * w_item
                          + (hidden_pad + out_pad) * 4
                          + M * out_dim * o_item)
        cost = pl.CostEstimate(flops=int(flops), transcendentals=0,
                               bytes_accessed=int(bytes_accessed))

        w2_const = w2_resident  # W2/b2 index map is constant iff fully resident

        def build(single_buffer_weights):
            def wspec(shape, index_map, constant_index):
                if single_buffer_weights and constant_index:
                    # Constant index_map -> one VMEM buffer suffices; avoids
                    # the default double buffer, freeing VMEM for larger tiles.
                    return pl.BlockSpec(shape, index_map,
                                        pipeline_mode=pl.Buffered(1))
                return pl.BlockSpec(shape, index_map)

            in_specs = [
                pl.BlockSpec((tm, in_pad), lambda i, j: (i, 0)),
                wspec((in_pad, hidden_pad), lambda i, j: (0, 0), True),
                wspec((1, hidden_pad), lambda i, j: (0, 0), True),
                wspec((hidden_pad, tn), lambda i, j: (0, j), w2_const),
                wspec((1, tn), lambda i, j: (0, j), w2_const),
            ]

            n_w1 = 1 if single_buffer_weights else 2
            n_w2 = 1 if (single_buffer_weights and w2_const) else 2
            vmem_need = (2 * tm * in_pad * x_item
                         + n_w1 * w1_res
                         + n_w2 * (hidden_pad * tn * w_item + tn * 4)
                         + 2 * tm * tn * o_item
                         + tm * hidden_pad * h_item)
            # Above the scoped default, below physical VMEM.
            vmem_limit = min(int(vmem_need * 1.3) + (4 << 20), vmem_cap - (4 << 20))
            vmem_limit = min(max(vmem_limit, vmem_need + (2 << 20)), vmem_cap)

            return pl.pallas_call(
                _projector_kernel,
                out_shape=jax.ShapeDtypeStruct((m_pad, out_pad), o_dtype),
                grid_spec=pltpu.PrefetchScalarGridSpec(
                    num_scalar_prefetch=0,
                    grid=grid,
                    in_specs=in_specs,
                    out_specs=pl.BlockSpec((tm, tn), lambda i, j: (i, j)),
                    scratch_shapes=[pltpu.VMEM((tm, hidden_pad), compute_dtype)],
                ),
                compiler_params=pltpu.CompilerParams(
                    # Row axis shards across TensorCores (v7x megacore).  The
                    # out_dim axis MUST stay "arbitrary": the hidden-activation
                    # cache in h_ref is only valid if every j sees j == 0 first.
                    dimension_semantics=("parallel", "arbitrary"),
                    vmem_limit_bytes=int(vmem_limit),
                ),
                cost_estimate=cost,
            )

        try:
            out2d = build(True)(x2d, w1p, b1p, w2p, b2p)
        except Exception as first_err:
            # Only masks a pipeline_mode=pl.Buffered(1) API rejection on older
            # JAX builds: retry with default double-buffered weights, and
            # re-raise the original error if the plain build fails too.
            try:
                out2d = build(False)(x2d, w1p, b1p, w2p, b2p)
            except Exception:
                raise first_err

        out2d = out2d[:M, :out_dim]
        return out2d.reshape(*lead, out_dim)

    return project


def multimodal_projector(x, w1, b1, w2, b2, **kwargs):
    """One-shot convenience wrapper (re-pads the weights every call; prefer
    make_multimodal_projector for repeated use)."""
    return make_multimodal_projector(w1, b1, w2, b2, **kwargs)(x)


def init_projector_params(key, in_dim, out_dim, hidden_dim=None,
                          dtype=jnp.float32):
    """Mimics PyTorch kaiming_normal_(mode='fan_out', nonlinearity='relu'):
       std = sqrt(2 / out_features) for a Linear weight of shape [out, in].
       Weights returned transposed to [in, out] for the x @ W layout."""
    if hidden_dim is None:
        hidden_dim = out_dim
    k1, k2 = jax.random.split(key)
    std1 = (2.0 / hidden_dim) ** 0.5
    std2 = (2.0 / out_dim) ** 0.5
    w1 = (jax.random.normal(k1, (hidden_dim, in_dim), dtype) * std1).T
    b1 = jnp.zeros((hidden_dim,), dtype)
    w2 = (jax.random.normal(k2, (out_dim, hidden_dim), dtype) * std2).T
    b2 = jnp.zeros((out_dim,), dtype)
    return w1, b1, w2, b2


if __name__ == "__main__":
    key = jax.random.PRNGKey(0)
    kx, kp = jax.random.split(key)

    B, S = 2, 8
    in_dim, hidden_dim, out_dim = 32, 64, 48

    x = jax.random.normal(kx, (B, S, in_dim), jnp.float32)
    w1, b1, w2, b2 = init_projector_params(kp, in_dim, out_dim, hidden_dim)

    # Reference in plain JAX (same math as the PyTorch forward).
    ref = jnp.maximum(x.reshape(-1, in_dim) @ w1 + b1, 0.0) @ w2 + b2
    ref = ref.reshape(B, S, out_dim)

    # Exact path (f32 MXU operands) -- matches the f32 reference tightly.
    proj_f32 = make_multimodal_projector(w1, b1, w2, b2,
                                         compute_dtype=jnp.float32)
    out_f32 = jax.block_until_ready(proj_f32(x))
    assert out_f32.shape == (B, S, out_dim)
    assert jnp.allclose(out_f32, ref, atol=2e-5, rtol=2e-5), \
        float(jnp.max(jnp.abs(out_f32 - ref)))

    # Default fast path: bf16 MXU operands with f32 accumulation
    # (looser tolerance, per documented precision trade-off).
    proj_bf16 = make_multimodal_projector(w1, b1, w2, b2)
    out_bf16 = jax.block_until_ready(proj_bf16(x))
    assert out_bf16.shape == (B, S, out_dim)
    assert jnp.allclose(out_bf16, ref, atol=2e-1, rtol=5e-2), \
        float(jnp.max(jnp.abs(out_bf16 - ref)))

    print("KERNEL_OK")
</pallas_src>

<mosaic_0001>
module attributes {stable_mosaic.version = 11 : i64} {
  func.func @_projector_kernel(%arg0: i32, %arg1: i32, %arg2: memref<16x128xf32, #tpu.memory_space<vmem>>, %arg3: memref<128x128xf32, #tpu.memory_space<vmem>>, %arg4: memref<1x128xf32, #tpu.memory_space<vmem>>, %arg5: memref<128x128xf32, #tpu.memory_space<vmem>>, %arg6: memref<1x128xf32, #tpu.memory_space<vmem>>, %arg7: memref<16x128xf32, #tpu.memory_space<vmem>>, %arg8: memref<16x128xf32, #tpu.memory_space<vmem>>) attributes {dimension_semantics = [#tpu.dimension_semantics<parallel>, #tpu.dimension_semantics<arbitrary>], iteration_bounds = array<i64: 1, 1>, scalar_prefetch = 0 : i64, scratch_operands = 1 : i64, tpu.core_type = #tpu.core_type<tc>, window_params = [{transform_indices = @transform_0, window_bounds = array<i64: 16, 128>}, {pipeline_mode = #tpu.pipeline_mode<synchronous>, transform_indices = @transform_1, window_bounds = array<i64: 128, 128>}, {pipeline_mode = #tpu.pipeline_mode<synchronous>, transform_indices = @transform_2, window_bounds = array<i64: 1, 128>}, {pipeline_mode = #tpu.pipeline_mode<synchronous>, transform_indices = @transform_3, window_bounds = array<i64: 128, 128>}, {pipeline_mode = #tpu.pipeline_mode<synchronous>, transform_indices = @transform_4, window_bounds = array<i64: 1, 128>}, {transform_indices = @transform_5, window_bounds = array<i64: 16, 128>}]} {
    %c0_i32 = arith.constant 0 : i32
    %0 = arith.cmpi eq, %arg1, %c0_i32 : i32
    %1 = arith.extui %0 : i1 to i32
    %c0_i32_0 = arith.constant 0 : i32
    %2 = arith.cmpi ne, %1, %c0_i32_0 : i32
    scf.if %2 {
      %c0_8 = arith.constant 0 : index
      %c0_9 = arith.constant 0 : index
      %10 = vector.load %arg2[%c0_8, %c0_9] : memref<16x128xf32, #tpu.memory_space<vmem>>, vector<16x128xf32>
      %c0_10 = arith.constant 0 : index
      %c0_11 = arith.constant 0 : index
      %11 = vector.load %arg3[%c0_10, %c0_11] : memref<128x128xf32, #tpu.memory_space<vmem>>, vector<128x128xf32>
      %cst_12 = arith.constant dense<0.000000e+00> : vector<16x128xf32>
      %12 = tpu.matmul %10, %11, %cst_12 {dimension_numbers = #tpu.dot_dimension_numbers<[1], [0], [0], [1], [0, 0, 1, 1], [], []>} : vector<16x128xf32>, vector<128x128xf32>, vector<16x128xf32> -> vector<16x128xf32>
      %c0_13 = arith.constant 0 : index
      %c0_14 = arith.constant 0 : index
      %13 = vector.load %arg4[%c0_13, %c0_14] : memref<1x128xf32, #tpu.memory_space<vmem>>, vector<1x128xf32>
      %14 = vector.broadcast %13 : vector<1x128xf32> to vector<16x128xf32>
      %15 = arith.addf %12, %14 : vector<16x128xf32>
      %cst_15 = arith.constant 0.000000e+00 : f32
      %16 = vector.broadcast %cst_15 : f32 to vector<16x128xf32>
      %17 = arith.maximumf %15, %16 : vector<16x128xf32>
      %c0_16 = arith.constant 0 : index
      %c0_17 = arith.constant 0 : index
      %18 = vector.load %arg8[%c0_16, %c0_17] : memref<16x128xf32, #tpu.memory_space<vmem>>, vector<16x128xf32>
      tpu.vector_store %arg8[%c0_16, %c0_17], %17 {strides = array<i32>} : memref<16x128xf32, #tpu.memory_space<vmem>>, vector<16x128xf32>,
    } else {
    }
    %c0 = arith.constant 0 : index
    %c0_1 = arith.constant 0 : index
    %3 = vector.load %arg8[%c0, %c0_1] : memref<16x128xf32, #tpu.memory_space<vmem>>, vector<16x128xf32>
    %c0_2 = arith.constant 0 : index
    %c0_3 = arith.constant 0 : index
    %4 = vector.load %arg5[%c0_2, %c0_3] : memref<128x128xf32, #tpu.memory_space<vmem>>, vector<128x128xf32>
    %cst = arith.constant dense<0.000000e+00> : vector<16x128xf32>
    %5 = tpu.matmul %3, %4, %cst {dimension_numbers = #tpu.dot_dimension_numbers<[1], [0], [0], [1], [0, 0, 1, 1], [], []>} : vector<16x128xf32>, vector<128x128xf32>, vector<16x128xf32> -> vector<16x128xf32>
    %c0_4 = arith.constant 0 : index
    %c0_5 = arith.constant 0 : index
    %6 = vector.load %arg6[%c0_4, %c0_5] : memref<1x128xf32, #tpu.memory_space<vmem>>, vector<1x128xf32>
    %7 = vector.broadcast %6 : vector<1x128xf32> to vector<16x128xf32>
    %8 = arith.addf %5, %7 : vector<16x128xf32>
    %c0_6 = arith.constant 0 : index
    %c0_7 = arith.constant 0 : index
    %9 = vector.load %arg7[%c0_6, %c0_7] : memref<16x128xf32, #tpu.memory_space<vmem>>, vector<16x128xf32>
    tpu.vector_store %arg7[%c0_6, %c0_7], %8 {strides = array<i32>} : memref<16x128xf32, #tpu.memory_space<vmem>>, vector<16x128xf32>,
    return
  }
  func.func @transform_0(%arg0: i32, %arg1: i32) -> (i32, i32) {
    %c0_i32 = arith.constant 0 : i32
    %c0_i32_0 = arith.constant 0 : i32
    return %arg0, %c0_i32 : i32, i32
  }
  func.func @transform_1(%arg0: i32, %arg1: i32) -> (i32, i32) {
    %c0_i32 = arith.constant 0 : i32
    %c0_i32_0 = arith.constant 0 : i32
    %c0_i32_1 = arith.constant 0 : i32
    return %c0_i32, %c0_i32_0 : i32, i32
  }
  func.func @transform_2(%arg0: i32, %arg1: i32) -> (i32, i32) {
    %c0_i32 = arith.constant 0 : i32
    %c0_i32_0 = arith.constant 0 : i32
    %c0_i32_1 = arith.constant 0 : i32
    return %c0_i32, %c0_i32_0 : i32, i32
  }
  func.func @transform_3(%arg0: i32, %arg1: i32) -> (i32, i32) {
    %c0_i32 = arith.constant 0 : i32
    %c0_i32_0 = arith.constant 0 : i32
    return %c0_i32, %arg1 : i32, i32
  }
  func.func @transform_4(%arg0: i32, %arg1: i32) -> (i32, i32) {
    %c0_i32 = arith.constant 0 : i32
    %c0_i32_0 = arith.constant 0 : i32
    return %c0_i32, %arg1 : i32, i32
  }
  func.func @transform_5(%arg0: i32, %arg1: i32) -> (i32, i32) {
    %c0_i32 = arith.constant 0 : i32
    return %arg0, %arg1 : i32, i32
  }
}

module attributes {stable_mosaic.version = 11 : i64} {
  func.func @_projector_kernel(%arg0: i32, %arg1: i32, %arg2: memref<16x128xf32, #tpu.memory_space<vmem>>, %arg3: memref<128x128xf32, #tpu.memory_space<vmem>>, %arg4: memref<1x128xf32, #tpu.memory_space<vmem>>, %arg5: memref<128x128xf32, #tpu.memory_space<vmem>>, %arg6: memref<1x128xf32, #tpu.memory_space<vmem>>, %arg7: memref<16x128xf32, #tpu.memory_space<vmem>>, %arg8: memref<16x128xf32, #tpu.memory_space<vmem>>) attributes {dimension_semantics = [#tpu.dimension_semantics<parallel>, #tpu.dimension_semantics<arbitrary>], iteration_bounds = array<i64: 1, 1>, scalar_prefetch = 0 : i64, scratch_operands = 1 : i64, tpu.core_type = #tpu.core_type<tc>, window_params = [{transform_indices = @transform_0, window_bounds = array<i64: 16, 128>}, {pipeline_mode = #tpu.pipeline_mode<synchronous>, transform_indices = @transform_1, window_bounds = array<i64: 128, 128>}, {pipeline_mode = #tpu.pipeline_mode<synchronous>, transform_indices = @transform_2, window_bounds = array<i64: 1, 128>}, {transform_indices = @transform_3, window_bounds = array<i64: 128, 128>}, {transform_indices = @transform_4, window_bounds = array<i64: 1, 128>}, {transform_indices = @transform_5, window_bounds = array<i64: 16, 128>}]} {
    %c0_i32 = arith.constant 0 : i32
    %0 = arith.cmpi eq, %arg1, %c0_i32 : i32
    %1 = arith.extui %0 : i1 to i32
    %c0_i32_0 = arith.constant 0 : i32
    %2 = arith.cmpi ne, %1, %c0_i32_0 : i32
    scf.if %2 {
      %c0_8 = arith.constant 0 : index
      %c0_9 = arith.constant 0 : index
      %10 = vector.load %arg2[%c0_8, %c0_9] : memref<16x128xf32, #tpu.memory_space<vmem>>, vector<16x128xf32>
      %c0_10 = arith.constant 0 : index
      %c0_11 = arith.constant 0 : index
      %11 = vector.load %arg3[%c0_10, %c0_11] : memref<128x128xf32, #tpu.memory_space<vmem>>, vector<128x128xf32>
      %cst_12 = arith.constant dense<0.000000e+00> : vector<16x128xf32>
      %12 = tpu.matmul %10, %11, %cst_12 {dimension_numbers = #tpu.dot_dimension_numbers<[1], [0], [0], [1], [0, 0, 1, 1], [], []>} : vector<16x128xf32>, vector<128x128xf32>, vector<16x128xf32> -> vector<16x128xf32>
      %c0_13 = arith.constant 0 : index
      %c0_14 = arith.constant 0 : index
      %13 = vector.load %arg4[%c0_13, %c0_14] : memref<1x128xf32, #tpu.memory_space<vmem>>, vector<1x128xf32>
      %14 = vector.broadcast %13 : vector<1x128xf32> to vector<16x128xf32>
      %15 = arith.addf %12, %14 : vector<16x128xf32>
      %cst_15 = arith.constant 0.000000e+00 : f32
      %16 = vector.broadcast %cst_15 : f32 to vector<16x128xf32>
      %17 = arith.maximumf %15, %16 : vector<16x128xf32>
      %c0_16 = arith.constant 0 : index
      %c0_17 = arith.constant 0 : index
      %18 = vector.load %arg8[%c0_16, %c0_17] : memref<16x128xf32, #tpu.memory_space<vmem>>, vector<16x128xf32>
      tpu.vector_store %arg8[%c0_16, %c0_17], %17 {strides = array<i32>} : memref<16x128xf32, #tpu.memory_space<vmem>>, vector<16x128xf32>,
    } else {
    }
    %c0 = arith.constant 0 : index
    %c0_1 = arith.constant 0 : index
    %3 = vector.load %arg8[%c0, %c0_1] : memref<16x128xf32, #tpu.memory_space<vmem>>, vector<16x128xf32>
    %c0_2 = arith.constant 0 : index
    %c0_3 = arith.constant 0 : index
    %4 = vector.load %arg5[%c0_2, %c0_3] : memref<128x128xf32, #tpu.memory_space<vmem>>, vector<128x128xf32>
    %cst = arith.constant dense<0.000000e+00> : vector<16x128xf32>
    %5 = tpu.matmul %3, %4, %cst {dimension_numbers = #tpu.dot_dimension_numbers<[1], [0], [0], [1], [0, 0, 1, 1], [], []>} : vector<16x128xf32>, vector<128x128xf32>, vector<16x128xf32> -> vector<16x128xf32>
    %c0_4 = arith.constant 0 : index
    %c0_5 = arith.constant 0 : index
    %6 = vector.load %arg6[%c0_4, %c0_5] : memref<1x128xf32, #tpu.memory_space<vmem>>, vector<1x128xf32>
    %7 = vector.broadcast %6 : vector<1x128xf32> to vector<16x128xf32>
    %8 = arith.addf %5, %7 : vector<16x128xf32>
    %c0_6 = arith.constant 0 : index
    %c0_7 = arith.constant 0 : index
    %9 = vector.load %arg7[%c0_6, %c0_7] : memref<16x128xf32, #tpu.memory_space<vmem>>, vector<16x128xf32>
    tpu.vector_store %arg7[%c0_6, %c0_7], %8 {strides = array<i32>} : memref<16x128xf32, #tpu.memory_space<vmem>>, vector<16x128xf32>,
    return
  }
  func.func @transform_0(%arg0: i32, %arg1: i32) -> (i32, i32) {
    %c0_i32 = arith.constant 0 : i32
    %c0_i32_0 = arith.constant 0 : i32
    return %arg0, %c0_i32 : i32, i32
  }
  func.func @transform_1(%arg0: i32, %arg1: i32) -> (i32, i32) {
    %c0_i32 = arith.constant 0 : i32
    %c0_i32_0 = arith.constant 0 : i32
    %c0_i32_1 = arith.constant 0 : i32
    return %c0_i32, %c0_i32_0 : i32, i32
  }
  func.func @transform_2(%arg0: i32, %arg1: i32) -> (i32, i32) {
    %c0_i32 = arith.constant 0 : i32
    %c0_i32_0 = arith.constant 0 : i32
    %c0_i32_1 = arith.constant 0 : i32
    return %c0_i32, %c0_i32_0 : i32, i32
  }
  func.func @transform_3(%arg0: i32, %arg1: i32) -> (i32, i32) {
    %c0_i32 = arith.constant 0 : i32
    %c0_i32_0 = arith.constant 0 : i32
    return %c0_i32, %arg1 : i32, i32
  }
  func.func @transform_4(%arg0: i32, %arg1: i32) -> (i32, i32) {
    %c0_i32 = arith.constant 0 : i32
    %c0_i32_0 = arith.constant 0 : i32
    return %c0_i32, %arg1 : i32, i32
  }
  func.func @transform_5(%arg0: i32, %arg1: i32) -> (i32, i32) {
    %c0_i32 = arith.constant 0 : i32
    return %arg0, %arg1 : i32, i32
  }
}

</mosaic_0001>

<llo_original>
// kernel: tpu_custom_call.1
$region0: #{tpu_custom_call.1}
  #allocation0 [shape = 'u32[]', space=smem, size = 0x4, offset = 0x4, fixed_abs, tag = 'smem constant byte address 0x4 - core index']
  #allocation1 [shape = 'u32[144,128]{1,0:T(1,128)}', space=vmem, size = 0x12000, scoped, tag = 'internal scratch']
  #allocation2 [shape = 'f32[16,128]{1,0:T(8,128)}', space=vmem, size = 0x2000, scoped, tag = 'scratch operand']
  %s0 = inlined_call_operand.hbm [shape: f32[16,128], index: 0, kind: input, shape index: {}]
  %s1 = inlined_call_operand.hbm [shape: f32[128,128], index: 1, kind: input, shape index: {}]
  %s2 = inlined_call_operand.vmem [shape: f32[1,128], index: 2, kind: input, shape index: {}]
  %s3 = inlined_call_operand.hbm [shape: f32[128,128], index: 3, kind: input, shape index: {}]
  %s4 = inlined_call_operand.vmem [shape: f32[1,128], index: 4, kind: input, shape index: {}]
  %s5 = inlined_call_operand.hbm [shape: f32[16,128], index: 5, kind: output, shape index: {}]
  %s6 = sld [smem:[#allocation0]]
  $region46: #{tpu_custom_call.1} parent=0
    _
  %s8 = ssub.s32 1, %s6
  %s9 = scalar_select 0, %s8, %s6
  $region1: #{tpu_custom_call.1} parent=0
    #allocation3 [shape = 'u8[8192]{0}', space=vmem, size = 0x2000, scoped, tag = 'input window, operand 0, single buffered']
    #allocation4 [shape = 's32[1]{0}', space=sflag, size = 0x4, scoped, tag = 'scoped memory for tpu_custom_call.1']
    #allocation5 [shape = 's32[1]{0}', space=sflag, size = 0x4, scoped, tag = 'scoped memory for tpu_custom_call.1']
    #allocation6 [shape = 'u8[65536]{0}', space=vmem, size = 0x10000, scoped, tag = 'input window, operand 1, single buffered']
    #allocation7 [shape = 's32[1]{0}', space=sflag, size = 0x4, scoped, tag = 'scoped memory for tpu_custom_call.1']
    #allocation8 [shape = 'u8[65536]{0}', space=vmem, size = 0x10000, scoped, tag = 'input window, operand 3, single buffered']
    #allocation9 [shape = 'u8[8192]{0}', space=vmem, size = 0x2000, scoped, tag = 'output window, operand 0, single buffered']
    %10 = vsyncpa [#allocation4], 0
    %11 = vsyncpa [#allocation7], 0
    %12 = vsyncpa [#allocation5], 0
    // Predicated region
    $region2: #{tpu_custom_call.1} parent=1 // pred_check
      _
    $region3: #{tpu_custom_call.1} parent=1 // pred_check_branch
      %14 = sbr.rel (0) target = $region5
    $region4: #{tpu_custom_call.1} parent=1 // pred_region
      %s16 = ssub.s32 256, 256
      %17 = vsyncadd [#allocation4], %s16
      %s18 = sshll.u32 [#allocation3], 4
      %s19 = int_to_ptr.vmem [resolvable:$true] %s18
      %24 = dma.hbm_to_vmem [thread:$0]  %s0, 256, %s19, [#allocation4], 128, 128, 8
    $region5: #{tpu_custom_call.1} parent=1 // pred_fallthru
      _
    // Predicated region
    $region6: #{tpu_custom_call.1} parent=1 // pred_check
      _
    $region7: #{tpu_custom_call.1} parent=1 // pred_check_branch
      %26 = sbr.rel (0) target = $region9
    $region8: #{tpu_custom_call.1} parent=1 // pred_region
      %s28 = ssub.s32 2048, 2048
      %29 = vsyncadd [#allocation7], %s28
      %s30 = sshll.u32 [#allocation6], 4
      %s31 = int_to_ptr.vmem [resolvable:$true] %s30
      %36 = dma.hbm_to_vmem [thread:$0]  %s1, 2048, %s31, [#allocation7], 128, 128, 8
    $region9: #{tpu_custom_call.1} parent=1 // pred_fallthru
      _
    // Predicated region
    $region10: #{tpu_custom_call.1} parent=1 // pred_check
      _
    $region11: #{tpu_custom_call.1} parent=1 // pred_check_branch
      %38 = sbr.rel (0) target = $region13
    $region12: #{tpu_custom_call.1} parent=1 // pred_region
      _
    $region13: #{tpu_custom_call.1} parent=1 // pred_fallthru
      _
    // Predicated region
    $region14: #{tpu_custom_call.1} parent=1 // pred_check
      _
    $region15: #{tpu_custom_call.1} parent=1 // pred_check_branch
      %40 = sbr.rel (0) target = $region17
    $region16: #{tpu_custom_call.1} parent=1 // pred_region
      %s42 = ssub.s32 2048, 2048
      %43 = vsyncadd [#allocation7], %s42
      %s44 = sshll.u32 [#allocation8], 4
      %s45 = int_to_ptr.vmem [resolvable:$true] %s44
      %50 = dma.hbm_to_vmem [thread:$0]  %s3, 2048, %s45, [#allocation7], 128, 128, 8
    $region17: #{tpu_custom_call.1} parent=1 // pred_fallthru
      _
    // Predicated region
    $region18: #{tpu_custom_call.1} parent=1 // pred_check
      _
    $region19: #{tpu_custom_call.1} parent=1 // pred_check_branch
      %52 = sbr.rel (0) target = $region21
    $region20: #{tpu_custom_call.1} parent=1 // pred_region
      _
    $region21: #{tpu_custom_call.1} parent=1 // pred_fallthru
      _
    // Predicated region
    $region22: #{tpu_custom_call.1} parent=1 // pred_check
      _
    $region23: #{tpu_custom_call.1} parent=1 // pred_check_branch
      %54 = sbr.rel (0) target = $region25
    $region24: #{tpu_custom_call.1} parent=1 // pred_region
      %55 = dma.done [#allocation4], 256
    $region25: #{tpu_custom_call.1} parent=1 // pred_fallthru
      _
    // Predicated region
    $region26: #{tpu_custom_call.1} parent=1 // pred_check
      _
    $region27: #{tpu_custom_call.1} parent=1 // pred_check_branch
      %57 = sbr.rel (0) target = $region29
    $region28: #{tpu_custom_call.1} parent=1 // pred_region
      %58 = dma.done [#allocation7], 2048
    $region29: #{tpu_custom_call.1} parent=1 // pred_fallthru
      _
    // Predicated region
    $region30: #{tpu_custom_call.1} parent=1 // pred_check
      _
    $region31: #{tpu_custom_call.1} parent=1 // pred_check_branch
      %60 = sbr.rel (0) target = $region33
    $region32: #{tpu_custom_call.1} parent=1 // pred_region
      %61 = dma.done [#allocation7], 2048
    $region33: #{tpu_custom_call.1} parent=1 // pred_fallthru
      _
    %p62 = scmp.eq.s32.totalorder 0, 0
    // Predicated region
    $region34: #{tpu_custom_call.1} parent=1 // pred_check
      %p63 = pneg %p62
    $region35: #{tpu_custom_call.1} parent=1 // pred_check_branch
      %65 = sbr.rel (%p63) target = $region37
    $region36: #{tpu_custom_call.1} parent=1 // pred_region
      %v66 = vld [vmem:[#allocation3] sm:$0xff]
      %v67 = vld [vmem:[#allocation3 + $0x8] sm:$0xff]
      %v68 = vld [vmem:[#allocation6] sm:$0xff]
      %v69 = vld [vmem:[#allocation6 + $0x8] sm:$0xff]
      %v70 = vld [vmem:[#allocation6 + $0x10] sm:$0xff]
      %v71 = vld [vmem:[#allocation6 + $0x18] sm:$0xff]
      %v72 = vld [vmem:[#allocation6 + $0x20] sm:$0xff]
      %v73 = vld [vmem:[#allocation6 + $0x28] sm:$0xff]
      %v74 = vld [vmem:[#allocation6 + $0x30] sm:$0xff]
      %v75 = vld [vmem:[#allocation6 + $0x38] sm:$0xff]
      %v76 = vld [vmem:[#allocation6 + $0x40] sm:$0xff]
      %v77 = vld [vmem:[#allocation6 + $0x48] sm:$0xff]
      %v78 = vld [vmem:[#allocation6 + $0x50] sm:$0xff]
      %v79 = vld [vmem:[#allocation6 + $0x58] sm:$0xff]
      %v80 = vld [vmem:[#allocation6 + $0x60] sm:$0xff]
      %v81 = vld [vmem:[#allocation6 + $0x68] sm:$0xff]
      %v82 = vld [vmem:[#allocation6 + $0x70] sm:$0xff]
      %v83 = vld [vmem:[#allocation6 + $0x78] sm:$0xff]
      %v84 = vld [vmem:[%s2] sm:$0x1]
      %v86 = vlaneseq
      %v87 = vshrl.u32 %v86, 7
      %v88 = vsub.s32 0, %v87
      %v89 = vrot.slane %v84, %v88
      %91 = vmatprep.subr.mxu0 0.0
      %92 = vmatpush1.msra.mxu0 %v68
      %93 = vmatprep.subr.mxu0 0.0
      %94 = vmatpush1.msra.mxu0 %v69
      %95 = vmatprep.subr.mxu0 0.0
      %96 = vmatpush1.msra.mxu0 %v70
      %97 = vmatprep.subr.mxu0 0.0
      %98 = vmatpush1.msra.mxu0 %v71
      %99 = vmatprep.subr.mxu0 0.0
      %100 = vmatpush1.msra.mxu0 %v72
      %101 = vmatprep.subr.mxu0 0.0
      %102 = vmatpush1.msra.mxu0 %v73
      %103 = vmatprep.subr.mxu0 0.0
      %104 = vmatpush1.msra.mxu0 %v74
      %105 = vmatprep.subr.mxu0 0.0
      %106 = vmatpush1.msra.mxu0 %v75
      %107 = vmatprep.subr.mxu0 0.0
      %108 = vmatpush1.msra.mxu0 %v76
      %109 = vmatprep.subr.mxu0 0.0
      %110 = vmatpush1.msra.mxu0 %v77
      %111 = vmatprep.subr.mxu0 0.0
      %112 = vmatpush1.msra.mxu0 %v78
      %113 = vmatprep.subr.mxu0 0.0
      %114 = vmatpush1.msra.mxu0 %v79
      %115 = vmatprep.subr.mxu0 0.0
      %116 = vmatpush1.msra.mxu0 %v80
      %117 = vmatprep.subr.mxu0 0.0
      %118 = vmatpush1.msra.mxu0 %v81
      %119 = vmatprep.subr.mxu0 0.0
      %120 = vmatpush1.msra.mxu0 %v82
      %121 = vmatprep.subr.mxu0 0.0
      %122 = vmatpush1.msra.mxu0 %v83
      %123 = vmatprep.subr.mxu0 0.0
      %124 = vmatpush1.msra.mxu0 0.0
      %125 = vmatprep.subr.mxu0 0.0
      %126 = vmatpush1.msra.mxu0 0.0
      %127 = vmatprep.subr.mxu0 0.0
      %128 = vmatpush1.msra.mxu0 0.0
      %129 = vmatprep.subr.mxu0 0.0
      %130 = vmatpush1.msra.mxu0 0.0
      %131 = vmatprep.subr.mxu0 0.0
      %132 = vmatpush1.msra.mxu0 0.0
      %133 = vmatprep.subr.mxu0 0.0
      %134 = vmatpush1.msra.mxu0 0.0
      %135 = vmatprep.subr.mxu0 0.0
      %136 = vmatpush1.msra.mxu0 0.0
      %137 = vmatprep.subr.mxu0 0.0
      %138 = vmatpush1.msra.mxu0 0.0
      %139 = vmatprep.subr.mxu0 0.0
      %140 = vmatpush1.msra.mxu0 0.0
      %141 = vmatprep.subr.mxu0 0.0
      %142 = vmatpush1.msra.mxu0 0.0
      %143 = vmatprep.subr.mxu0 0.0
      %144 = vmatpush1.msra.mxu0 0.0
      %145 = vmatprep.subr.mxu0 0.0
      %146 = vmatpush1.msra.mxu0 0.0
      %147 = vmatprep.subr.mxu0 0.0
      %148 = vmatpush1.msra.mxu0 0.0
      %149 = vmatprep.subr.mxu0 0.0
      %150 = vmatpush1.msra.mxu0 0.0
      %151 = vmatprep.subr.mxu0 0.0
      %152 = vmatpush1.msra.mxu0 0.0
      %153 = vmatprep.subr.mxu0 0.0
      %154 = vmatpush1.msra.mxu0 0.0
      %155 = vmatprep.mubr.f32.mxu0 0.0
      %156 = vmatmul.mubr.f32.gmra.mrb[0].mxu0 %v66
      %v157 = vpop.f32.mrb[0].mxu0
      %v158 = vadd.f32 %v89, %v157
      %v159 = vpop.f32.mrb[0].mxu0
      %160 = vmatprep.mubr.f32.mxu0 0.0
      %161 = vmatmul.mubr.f32.gmra.mrb[0].mxu0 %v67
      %v162 = vpop.f32.mrb[0].mxu0
      %v163 = vadd.f32 %v89, %v162
      %v164 = vpop.f32.mrb[0].mxu0
      %165 = vdwg.mxu0
      %v166 = vmax.f32 %v158, 0.0
      %v167 = vmax.f32 %v163, 0.0
      %168 = vst [vmem:[#allocation2] sm:$0xff] %v166
      %169 = vst [vmem:[#allocation2 + $0x8] sm:$0xff] %v167
    $region37: #{tpu_custom_call.1} parent=1 // pred_fallthru
      _
    %v170 = vld [vmem:[#allocation2] sm:$0xff]
    %v171 = vld [vmem:[#allocation2 + $0x8] sm:$0xff]
    %v172 = vld [vmem:[#allocation8] sm:$0xff]
    %v173 = vld [vmem:[#allocation8 + $0x8] sm:$0xff]
    %v174 = vld [vmem:[#allocation8 + $0x10] sm:$0xff]
    %v175 = vld [vmem:[#allocation8 + $0x18] sm:$0xff]
    %v176 = vld [vmem:[#allocation8 + $0x20] sm:$0xff]
    %v177 = vld [vmem:[#allocation8 + $0x28] sm:$0xff]
    %v178 = vld [vmem:[#allocation8 + $0x30] sm:$0xff]
    %v179 = vld [vmem:[#allocation8 + $0x38] sm:$0xff]
    %v180 = vld [vmem:[#allocation8 + $0x40] sm:$0xff]
    %v181 = vld [vmem:[#allocation8 + $0x48] sm:$0xff]
    %v182 = vld [vmem:[#allocation8 + $0x50] sm:$0xff]
    %v183 = vld [vmem:[#allocation8 + $0x58] sm:$0xff]
    %v184 = vld [vmem:[#allocation8 + $0x60] sm:$0xff]
    %v185 = vld [vmem:[#allocation8 + $0x68] sm:$0xff]
    %v186 = vld [vmem:[#allocation8 + $0x70] sm:$0xff]
    %v187 = vld [vmem:[#allocation8 + $0x78] sm:$0xff]
    %v188 = vld [vmem:[%s4] sm:$0x1]
    %v190 = vlaneseq
    %v191 = vshrl.u32 %v190, 7
    %v192 = vsub.s32 0, %v191
    %v193 = vrot.slane %v188, %v192
    %195 = vmatprep.subr.mxu0 0.0
    %196 = vmatpush1.msra.mxu0 %v172
    %197 = vmatprep.subr.mxu0 0.0
    %198 = vmatpush1.msra.mxu0 %v173
    %199 = vmatprep.subr.mxu0 0.0
    %200 = vmatpush1.msra.mxu0 %v174
    %201 = vmatprep.subr.mxu0 0.0
    %202 = vmatpush1.msra.mxu0 %v175
    %203 = vmatprep.subr.mxu0 0.0
    %204 = vmatpush1.msra.mxu0 %v176
    %205 = vmatprep.subr.mxu0 0.0
    %206 = vmatpush1.msra.mxu0 %v177
    %207 = vmatprep.subr.mxu0 0.0
    %208 = vmatpush1.msra.mxu0 %v178
    %209 = vmatprep.subr.mxu0 0.0
    %210 = vmatpush1.msra.mxu0 %v179
    %211 = vmatprep.subr.mxu0 0.0
    %212 = vmatpush1.msra.mxu0 %v180
    %213 = vmatprep.subr.mxu0 0.0
    %214 = vmatpush1.msra.mxu0 %v181
    %215 = vmatprep.subr.mxu0 0.0
    %216 = vmatpush1.msra.mxu0 %v182
    %217 = vmatprep.subr.mxu0 0.0
    %218 = vmatpush1.msra.mxu0 %v183
    %219 = vmatprep.subr.mxu0 0.0
    %220 = vmatpush1.msra.mxu0 %v184
    %221 = vmatprep.subr.mxu0 0.0
    %222 = vmatpush1.msra.mxu0 %v185
    %223 = vmatprep.subr.mxu0 0.0
    %224 = vmatpush1.msra.mxu0 %v186
    %225 = vmatprep.subr.mxu0 0.0
    %226 = vmatpush1.msra.mxu0 %v187
    %227 = vmatprep.subr.mxu0 0.0
    %228 = vmatpush1.msra.mxu0 0.0
    %229 = vmatprep.subr.mxu0 0.0
    %230 = vmatpush1.msra.mxu0 0.0
    %231 = vmatprep.subr.mxu0 0.0
    %232 = vmatpush1.msra.mxu0 0.0
    %233 = vmatprep.subr.mxu0 0.0
    %234 = vmatpush1.msra.mxu0 0.0
    %235 = vmatprep.subr.mxu0 0.0
    %236 = vmatpush1.msra.mxu0 0.0
    %237 = vmatprep.subr.mxu0 0.0
    %238 = vmatpush1.msra.mxu0 0.0
    %239 = vmatprep.subr.mxu0 0.0
    %240 = vmatpush1.msra.mxu0 0.0
    %241 = vmatprep.subr.mxu0 0.0
    %242 = vmatpush1.msra.mxu0 0.0
    %243 = vmatprep.subr.mxu0 0.0
    %244 = vmatpush1.msra.mxu0 0.0
    %245 = vmatprep.subr.mxu0 0.0
    %246 = vmatpush1.msra.mxu0 0.0
    %247 = vmatprep.subr.mxu0 0.0
    %248 = vmatpush1.msra.mxu0 0.0
    %249 = vmatprep.subr.mxu0 0.0
    %250 = vmatpush1.msra.mxu0 0.0
    %251 = vmatprep.subr.mxu0 0.0
    %252 = vmatpush1.msra.mxu0 0.0
    %253 = vmatprep.subr.mxu0 0.0
    %254 = vmatpush1.msra.mxu0 0.0
    %255 = vmatprep.subr.mxu0 0.0
    %256 = vmatpush1.msra.mxu0 0.0
    %257 = vmatprep.subr.mxu0 0.0
    %258 = vmatpush1.msra.mxu0 0.0
    %259 = vmatprep.mubr.f32.mxu0 0.0
    %260 = vmatmul.mubr.f32.gmra.mrb[0].mxu0 %v170
    %v261 = vpop.f32.mrb[0].mxu0
    %v262 = vadd.f32 %v193, %v261
    %v263 = vpop.f32.mrb[0].mxu0
    %264 = vmatprep.mubr.f32.mxu0 0.0
    %265 = vmatmul.mubr.f32.gmra.mrb[0].mxu0 %v171
    %v266 = vpop.f32.mrb[0].mxu0
    %v267 = vadd.f32 %v193, %v266
    %v268 = vpop.f32.mrb[0].mxu0
    %269 = vdwg.mxu0
    %270 = vst [vmem:[#allocation9] sm:$0xff] %v262
    %271 = vst [vmem:[#allocation9 + $0x8] sm:$0xff] %v267
    // Predicated region
    $region38: #{tpu_custom_call.1} parent=1 // pred_check
      _
    $region39: #{tpu_custom_call.1} parent=1 // pred_check_branch
      %273 = sbr.rel (0) target = $region41
    $region40: #{tpu_custom_call.1} parent=1 // pred_region
      %s275 = ssub.s32 256, 256
      %276 = vsyncadd [#allocation5], %s275
      %s277 = sshll.u32 [#allocation9], 4
      %s278 = int_to_ptr.vmem [resolvable:$true] %s277
      %283 = dma.vmem_to_hbm [thread:$0]  %s278, 256, %s5, [#allocation5], 128, 128, 8
    $region41: #{tpu_custom_call.1} parent=1 // pred_fallthru
      _
    // Predicated region
    $region42: #{tpu_custom_call.1} parent=1 // pred_check
      _
    $region43: #{tpu_custom_call.1} parent=1 // pred_check_branch
      %285 = sbr.rel (0) target = $region45
    $region44: #{tpu_custom_call.1} parent=1 // pred_region
      %286 = dma.done [#allocation5], 256
    $region45: #{tpu_custom_call.1} parent=1 // pred_fallthru
      _
    %287 = vsyncpa [#allocation4], 1
    %288 = vsyncpa [#allocation7], 1
    %289 = vsyncpa [#allocation5], 1

// kernel: tpu_custom_call.1
$region0: #{tpu_custom_call.1}
  #allocation0 [shape = 'u32[]', space=smem, size = 0x4, offset = 0x4, fixed_abs, tag = 'smem constant byte address 0x4 - core index']
  #allocation1 [shape = 'u32[144,128]{1,0:T(1,128)}', space=vmem, size = 0x12000, scoped, tag = 'internal scratch']
  #allocation2 [shape = 'f32[16,128]{1,0:T(8,128)}', space=vmem, size = 0x2000, scoped, tag = 'scratch operand']
  %s0 = inlined_call_operand.hbm [shape: f32[16,128], index: 0, kind: input, shape index: {}]
  %s1 = inlined_call_operand.hbm [shape: f32[128,128], index: 1, kind: input, shape index: {}]
  %s2 = inlined_call_operand.vmem [shape: f32[1,128], index: 2, kind: input, shape index: {}]
  %s3 = inlined_call_operand.hbm [shape: f32[128,128], index: 3, kind: input, shape index: {}]
  %s4 = inlined_call_operand.vmem [shape: f32[1,128], index: 4, kind: input, shape index: {}]
  %s5 = inlined_call_operand.hbm [shape: f32[16,128], index: 5, kind: output, shape index: {}]
  %s6 = sld [smem:[#allocation0]]
  $region46: #{tpu_custom_call.1} parent=0
    _
  %s8 = ssub.s32 1, %s6
  %s9 = scalar_select 0, %s8, %s6
  $region1: #{tpu_custom_call.1} parent=0
    #allocation3 [shape = 'u8[8192]{0}', space=vmem, size = 0x2000, scoped, tag = 'input window, operand 0, single buffered']
    #allocation4 [shape = 's32[1]{0}', space=sflag, size = 0x4, scoped, tag = 'scoped memory for tpu_custom_call.1']
    #allocation5 [shape = 's32[1]{0}', space=sflag, size = 0x4, scoped, tag = 'scoped memory for tpu_custom_call.1']
    #allocation6 [shape = 'u8[65536]{0}', space=vmem, size = 0x10000, scoped, tag = 'input window, operand 1, single buffered']
    #allocation7 [shape = 's32[1]{0}', space=sflag, size = 0x4, scoped, tag = 'scoped memory for tpu_custom_call.1']
    #allocation8 [shape = 'u8[65536]{0}', space=vmem, size = 0x10000, scoped, tag = 'input window, operand 3, single buffered']
    #allocation9 [shape = 'u8[8192]{0}', space=vmem, size = 0x2000, scoped, tag = 'output window, operand 0, single buffered']
    %10 = vsyncpa [#allocation4], 0
    %11 = vsyncpa [#allocation7], 0
    %12 = vsyncpa [#allocation5], 0
    // Predicated region
    $region2: #{tpu_custom_call.1} parent=1 // pred_check
      _
    $region3: #{tpu_custom_call.1} parent=1 // pred_check_branch
      %14 = sbr.rel (0) target = $region5
    $region4: #{tpu_custom_call.1} parent=1 // pred_region
      %s16 = ssub.s32 256, 256
      %17 = vsyncadd [#allocation4], %s16
      %s18 = sshll.u32 [#allocation3], 4
      %s19 = int_to_ptr.vmem [resolvable:$true] %s18
      %24 = dma.hbm_to_vmem [thread:$0]  %s0, 256, %s19, [#allocation4], 128, 128, 8
    $region5: #{tpu_custom_call.1} parent=1 // pred_fallthru
      _
    // Predicated region
    $region6: #{tpu_custom_call.1} parent=1 // pred_check
      _
    $region7: #{tpu_custom_call.1} parent=1 // pred_check_branch
      %26 = sbr.rel (0) target = $region9
    $region8: #{tpu_custom_call.1} parent=1 // pred_region
      %s28 = ssub.s32 2048, 2048
      %29 = vsyncadd [#allocation7], %s28
      %s30 = sshll.u32 [#allocation6], 4
      %s31 = int_to_ptr.vmem [resolvable:$true] %s30
      %36 = dma.hbm_to_vmem [thread:$0]  %s1, 2048, %s31, [#allocation7], 128, 128, 8
    $region9: #{tpu_custom_call.1} parent=1 // pred_fallthru
      _
    // Predicated region
    $region10: #{tpu_custom_call.1} parent=1 // pred_check
      _
    $region11: #{tpu_custom_call.1} parent=1 // pred_check_branch
      %38 = sbr.rel (0) target = $region13
    $region12: #{tpu_custom_call.1} parent=1 // pred_region
      _
    $region13: #{tpu_custom_call.1} parent=1 // pred_fallthru
      _
    // Predicated region
    $region14: #{tpu_custom_call.1} parent=1 // pred_check
      _
    $region15: #{tpu_custom_call.1} parent=1 // pred_check_branch
      %40 = sbr.rel (0) target = $region17
    $region16: #{tpu_custom_call.1} parent=1 // pred_region
      %s42 = ssub.s32 2048, 2048
      %43 = vsyncadd [#allocation7], %s42
      %s44 = sshll.u32 [#allocation8], 4
      %s45 = int_to_ptr.vmem [resolvable:$true] %s44
      %50 = dma.hbm_to_vmem [thread:$0]  %s3, 2048, %s45, [#allocation7], 128, 128, 8
    $region17: #{tpu_custom_call.1} parent=1 // pred_fallthru
      _
    // Predicated region
    $region18: #{tpu_custom_call.1} parent=1 // pred_check
      _
    $region19: #{tpu_custom_call.1} parent=1 // pred_check_branch
      %52 = sbr.rel (0) target = $region21
    $region20: #{tpu_custom_call.1} parent=1 // pred_region
      _
    $region21: #{tpu_custom_call.1} parent=1 // pred_fallthru
      _
    // Predicated region
    $region22: #{tpu_custom_call.1} parent=1 // pred_check
      _
    $region23: #{tpu_custom_call.1} parent=1 // pred_check_branch
      %54 = sbr.rel (0) target = $region25
    $region24: #{tpu_custom_call.1} parent=1 // pred_region
      %55 = dma.done [#allocation4], 256
    $region25: #{tpu_custom_call.1} parent=1 // pred_fallthru
      _
    // Predicated region
    $region26: #{tpu_custom_call.1} parent=1 // pred_check
      _
    $region27: #{tpu_custom_call.1} parent=1 // pred_check_branch
      %57 = sbr.rel (0) target = $region29
    $region28: #{tpu_custom_call.1} parent=1 // pred_region
      %58 = dma.done [#allocation7], 2048
    $region29: #{tpu_custom_call.1} parent=1 // pred_fallthru
      _
    // Predicated region
    $region30: #{tpu_custom_call.1} parent=1 // pred_check
      _
    $region31: #{tpu_custom_call.1} parent=1 // pred_check_branch
      %60 = sbr.rel (0) target = $region33
    $region32: #{tpu_custom_call.1} parent=1 // pred_region
      %61 = dma.done [#allocation7], 2048
    $region33: #{tpu_custom_call.1} parent=1 // pred_fallthru
      _
    %p62 = scmp.eq.s32.totalorder 0, 0
    // Predicated region
    $region34: #{tpu_custom_call.1} parent=1 // pred_check
      %p63 = pneg %p62
    $region35: #{tpu_custom_call.1} parent=1 // pred_check_branch
      %65 = sbr.rel (%p63) target = $region37
    $region36: #{tpu_custom_call.1} parent=1 // pred_region
      %v66 = vld [vmem:[#allocation3] sm:$0xff]
      %v67 = vld [vmem:[#allocation3 + $0x8] sm:$0xff]
      %v68 = vld [vmem:[#allocation6] sm:$0xff]
      %v69 = vld [vmem:[#allocation6 + $0x8] sm:$0xff]
      %v70 = vld [vmem:[#allocation6 + $0x10] sm:$0xff]
      %v71 = vld [vmem:[#allocation6 + $0x18] sm:$0xff]
      %v72 = vld [vmem:[#allocation6 + $0x20] sm:$0xff]
      %v73 = vld [vmem:[#allocation6 + $0x28] sm:$0xff]
      %v74 = vld [vmem:[#allocation6 + $0x30] sm:$0xff]
      %v75 = vld [vmem:[#allocation6 + $0x38] sm:$0xff]
      %v76 = vld [vmem:[#allocation6 + $0x40] sm:$0xff]
      %v77 = vld [vmem:[#allocation6 + $0x48] sm:$0xff]
      %v78 = vld [vmem:[#allocation6 + $0x50] sm:$0xff]
      %v79 = vld [vmem:[#allocation6 + $0x58] sm:$0xff]
      %v80 = vld [vmem:[#allocation6 + $0x60] sm:$0xff]
      %v81 = vld [vmem:[#allocation6 + $0x68] sm:$0xff]
      %v82 = vld [vmem:[#allocation6 + $0x70] sm:$0xff]
      %v83 = vld [vmem:[#allocation6 + $0x78] sm:$0xff]
      %v84 = vld [vmem:[%s2] sm:$0x1]
      %v86 = vlaneseq
      %v87 = vshrl.u32 %v86, 7
      %v88 = vsub.s32 0, %v87
      %v89 = vrot.slane %v84, %v88
      %91 = vmatprep.subr.mxu0 0.0
      %92 = vmatpush1.msra.mxu0 %v68
      %93 = vmatprep.subr.mxu0 0.0
      %94 = vmatpush1.msra.mxu0 %v69
      %95 = vmatprep.subr.mxu0 0.0
      %96 = vmatpush1.msra.mxu0 %v70
      %97 = vmatprep.subr.mxu0 0.0
      %98 = vmatpush1.msra.mxu0 %v71
      %99 = vmatprep.subr.mxu0 0.0
      %100 = vmatpush1.msra.mxu0 %v72
      %101 = vmatprep.subr.mxu0 0.0
      %102 = vmatpush1.msra.mxu0 %v73
      %103 = vmatprep.subr.mxu0 0.0
      %104 = vmatpush1.msra.mxu0 %v74
      %105 = vmatprep.subr.mxu0 0.0
      %106 = vmatpush1.msra.mxu0 %v75
      %107 = vmatprep.subr.mxu0 0.0
      %108 = vmatpush1.msra.mxu0 %v76
      %109 = vmatprep.subr.mxu0 0.0
      %110 = vmatpush1.msra.mxu0 %v77
      %111 = vmatprep.subr.mxu0 0.0
      %112 = vmatpush1.msra.mxu0 %v78
      %113 = vmatprep.subr.mxu0 0.0
      %114 = vmatpush1.msra.mxu0 %v79
      %115 = vmatprep.subr.mxu0 0.0
      %116 = vmatpush1.msra.mxu0 %v80
      %117 = vmatprep.subr.mxu0 0.0
      %118 = vmatpush1.msra.mxu0 %v81
      %119 = vmatprep.subr.mxu0 0.0
      %120 = vmatpush1.msra.mxu0 %v82
      %121 = vmatprep.subr.mxu0 0.0
      %122 = vmatpush1.msra.mxu0 %v83
      %123 = vmatprep.subr.mxu0 0.0
      %124 = vmatpush1.msra.mxu0 0.0
      %125 = vmatprep.subr.mxu0 0.0
      %126 = vmatpush1.msra.mxu0 0.0
      %127 = vmatprep.subr.mxu0 0.0
      %128 = vmatpush1.msra.mxu0 0.0
      %129 = vmatprep.subr.mxu0 0.0
      %130 = vmatpush1.msra.mxu0 0.0
      %131 = vmatprep.subr.mxu0 0.0
      %132 = vmatpush1.msra.mxu0 0.0
      %133 = vmatprep.subr.mxu0 0.0
      %134 = vmatpush1.msra.mxu0 0.0
      %135 = vmatprep.subr.mxu0 0.0
      %136 = vmatpush1.msra.mxu0 0.0
      %137 = vmatprep.subr.mxu0 0.0
      %138 = vmatpush1.msra.mxu0 0.0
      %139 = vmatprep.subr.mxu0 0.0
      %140 = vmatpush1.msra.mxu0 0.0
      %141 = vmatprep.subr.mxu0 0.0
      %142 = vmatpush1.msra.mxu0 0.0
      %143 = vmatprep.subr.mxu0 0.0
      %144 = vmatpush1.msra.mxu0 0.0
      %145 = vmatprep.subr.mxu0 0.0
      %146 = vmatpush1.msra.mxu0 0.0
      %147 = vmatprep.subr.mxu0 0.0
      %148 = vmatpush1.msra.mxu0 0.0
      %149 = vmatprep.subr.mxu0 0.0
      %150 = vmatpush1.msra.mxu0 0.0
      %151 = vmatprep.subr.mxu0 0.0
      %152 = vmatpush1.msra.mxu0 0.0
      %153 = vmatprep.subr.mxu0 0.0
      %154 = vmatpush1.msra.mxu0 0.0
      %155 = vmatprep.mubr.f32.mxu0 0.0
      %156 = vmatmul.mubr.f32.gmra.mrb[0].mxu0 %v66
      %v157 = vpop.f32.mrb[0].mxu0
      %v158 = vadd.f32 %v89, %v157
      %v159 = vpop.f32.mrb[0].mxu0
      %160 = vmatprep.mubr.f32.mxu0 0.0
      %161 = vmatmul.mubr.f32.gmra.mrb[0].mxu0 %v67
      %v162 = vpop.f32.mrb[0].mxu0
      %v163 = vadd.f32 %v89, %v162
      %v164 = vpop.f32.mrb[0].mxu0
      %165 = vdwg.mxu0
      %v166 = vmax.f32 %v158, 0.0
      %v167 = vmax.f32 %v163, 0.0
      %168 = vst [vmem:[#allocation2] sm:$0xff] %v166
      %169 = vst [vmem:[#allocation2 + $0x8] sm:$0xff] %v167
    $region37: #{tpu_custom_call.1} parent=1 // pred_fallthru
      _
    %v170 = vld [vmem:[#allocation2] sm:$0xff]
    %v171 = vld [vmem:[#allocation2 + $0x8] sm:$0xff]
    %v172 = vld [vmem:[#allocation8] sm:$0xff]
    %v173 = vld [vmem:[#allocation8 + $0x8] sm:$0xff]
    %v174 = vld [vmem:[#allocation8 + $0x10] sm:$0xff]
    %v175 = vld [vmem:[#allocation8 + $0x18] sm:$0xff]
    %v176 = vld [vmem:[#allocation8 + $0x20] sm:$0xff]
    %v177 = vld [vmem:[#allocation8 + $0x28] sm:$0xff]
    %v178 = vld [vmem:[#allocation8 + $0x30] sm:$0xff]
    %v179 = vld [vmem:[#allocation8 + $0x38] sm:$0xff]
    %v180 = vld [vmem:[#allocation8 + $0x40] sm:$0xff]
    %v181 = vld [vmem:[#allocation8 + $0x48] sm:$0xff]
    %v182 = vld [vmem:[#allocation8 + $0x50] sm:$0xff]
    %v183 = vld [vmem:[#allocation8 + $0x58] sm:$0xff]
    %v184 = vld [vmem:[#allocation8 + $0x60] sm:$0xff]
    %v185 = vld [vmem:[#allocation8 + $0x68] sm:$0xff]
    %v186 = vld [vmem:[#allocation8 + $0x70] sm:$0xff]
    %v187 = vld [vmem:[#allocation8 + $0x78] sm:$0xff]
    %v188 = vld [vmem:[%s4] sm:$0x1]
    %v190 = vlaneseq
    %v191 = vshrl.u32 %v190, 7
    %v192 = vsub.s32 0, %v191
    %v193 = vrot.slane %v188, %v192
    %195 = vmatprep.subr.mxu0 0.0
    %196 = vmatpush1.msra.mxu0 %v172
    %197 = vmatprep.subr.mxu0 0.0
    %198 = vmatpush1.msra.mxu0 %v173
    %199 = vmatprep.subr.mxu0 0.0
    %200 = vmatpush1.msra.mxu0 %v174
    %201 = vmatprep.subr.mxu0 0.0
    %202 = vmatpush1.msra.mxu0 %v175
    %203 = vmatprep.subr.mxu0 0.0
    %204 = vmatpush1.msra.mxu0 %v176
    %205 = vmatprep.subr.mxu0 0.0
    %206 = vmatpush1.msra.mxu0 %v177
    %207 = vmatprep.subr.mxu0 0.0
    %208 = vmatpush1.msra.mxu0 %v178
    %209 = vmatprep.subr.mxu0 0.0
    %210 = vmatpush1.msra.mxu0 %v179
    %211 = vmatprep.subr.mxu0 0.0
    %212 = vmatpush1.msra.mxu0 %v180
    %213 = vmatprep.subr.mxu0 0.0
    %214 = vmatpush1.msra.mxu0 %v181
    %215 = vmatprep.subr.mxu0 0.0
    %216 = vmatpush1.msra.mxu0 %v182
    %217 = vmatprep.subr.mxu0 0.0
    %218 = vmatpush1.msra.mxu0 %v183
    %219 = vmatprep.subr.mxu0 0.0
    %220 = vmatpush1.msra.mxu0 %v184
    %221 = vmatprep.subr.mxu0 0.0
    %222 = vmatpush1.msra.mxu0 %v185
    %223 = vmatprep.subr.mxu0 0.0
    %224 = vmatpush1.msra.mxu0 %v186
    %225 = vmatprep.subr.mxu0 0.0
    %226 = vmatpush1.msra.mxu0 %v187
    %227 = vmatprep.subr.mxu0 0.0
    %228 = vmatpush1.msra.mxu0 0.0
    %229 = vmatprep.subr.mxu0 0.0
    %230 = vmatpush1.msra.mxu0 0.0
    %231 = vmatprep.subr.mxu0 0.0
    %232 = vmatpush1.msra.mxu0 0.0
    %233 = vmatprep.subr.mxu0 0.0
    %234 = vmatpush1.msra.mxu0 0.0
    %235 = vmatprep.subr.mxu0 0.0
    %236 = vmatpush1.msra.mxu0 0.0
    %237 = vmatprep.subr.mxu0 0.0
    %238 = vmatpush1.msra.mxu0 0.0
    %239 = vmatprep.subr.mxu0 0.0
    %240 = vmatpush1.msra.mxu0 0.0
    %241 = vmatprep.subr.mxu0 0.0
    %242 = vmatpush1.msra.mxu0 0.0
    %243 = vmatprep.subr.mxu0 0.0
    %244 = vmatpush1.msra.mxu0 0.0
    %245 = vmatprep.subr.mxu0 0.0
    %246 = vmatpush1.msra.mxu0 0.0
    %247 = vmatprep.subr.mxu0 0.0
    %248 = vmatpush1.msra.mxu0 0.0
    %249 = vmatprep.subr.mxu0 0.0
    %250 = vmatpush1.msra.mxu0 0.0
    %251 = vmatprep.subr.mxu0 0.0
    %252 = vmatpush1.msra.mxu0 0.0
    %253 = vmatprep.subr.mxu0 0.0
    %254 = vmatpush1.msra.mxu0 0.0
    %255 = vmatprep.subr.mxu0 0.0
    %256 = vmatpush1.msra.mxu0 0.0
    %257 = vmatprep.subr.mxu0 0.0
    %258 = vmatpush1.msra.mxu0 0.0
    %259 = vmatprep.mubr.f32.mxu0 0.0
    %260 = vmatmul.mubr.f32.gmra.mrb[0].mxu0 %v170
    %v261 = vpop.f32.mrb[0].mxu0
    %v262 = vadd.f32 %v193, %v261
    %v263 = vpop.f32.mrb[0].mxu0
    %264 = vmatprep.mubr.f32.mxu0 0.0
    %265 = vmatmul.mubr.f32.gmra.mrb[0].mxu0 %v171
    %v266 = vpop.f32.mrb[0].mxu0
    %v267 = vadd.f32 %v193, %v266
    %v268 = vpop.f32.mrb[0].mxu0
    %269 = vdwg.mxu0
    %270 = vst [vmem:[#allocation9] sm:$0xff] %v262
    %271 = vst [vmem:[#allocation9 + $0x8] sm:$0xff] %v267
    // Predicated region
    $region38: #{tpu_custom_call.1} parent=1 // pred_check
      _
    $region39: #{tpu_custom_call.1} parent=1 // pred_check_branch
      %273 = sbr.rel (0) target = $region41
    $region40: #{tpu_custom_call.1} parent=1 // pred_region
      %s275 = ssub.s32 256, 256
      %276 = vsyncadd [#allocation5], %s275
      %s277 = sshll.u32 [#allocation9], 4
      %s278 = int_to_ptr.vmem [resolvable:$true] %s277
      %283 = dma.vmem_to_hbm [thread:$0]  %s278, 256, %s5, [#allocation5], 128, 128, 8
    $region41: #{tpu_custom_call.1} parent=1 // pred_fallthru
      _
    // Predicated region
    $region42: #{tpu_custom_call.1} parent=1 // pred_check
      _
    $region43: #{tpu_custom_call.1} parent=1 // pred_check_branch
      %285 = sbr.rel (0) target = $region45
    $region44: #{tpu_custom_call.1} parent=1 // pred_region
      %286 = dma.done [#allocation5], 256
    $region45: #{tpu_custom_call.1} parent=1 // pred_fallthru
      _
    %287 = vsyncpa [#allocation4], 1
    %288 = vsyncpa [#allocation7], 1
    %289 = vsyncpa [#allocation5], 1

</llo_original>
